<compile_context>
chip_gen: v5e
topology: v5e:2x2
jax: 0.10.0
libtpu: 0.0.40
codegen_flags: <defaults>
</compile_context>

<pallas_src>
import functools

import jax
import jax.numpy as jnp
from jax.experimental import pallas as pl
from jax.experimental.pallas import tpu as pltpu

LANES = 128
SUBLANES = 8
MAX_TILE_ROWS = 2048          # 2048 * 128 * 4B = 1 MiB per f32 input block


def _round_up(n, m):
    return ((n + m - 1) // m) * m


def _is_multi_tensorcore_chip():
    """True on chips exposing 2 TensorCores behind one device (v7x-style)."""
    try:
        kind = jax.devices()[0].device_kind.lower().replace(" ", "")
    except Exception:
        return False
    return ("v7" in kind) or ("tpu7" in kind)


def _check_loss_kernel(x_ref, y_ref, o_ref, *, tau, tile_rows, tiles_per_core,
                       rows, needs_mask, two_partials):
    if two_partials:
        c = pl.program_id(0)          # partial-sum index (one per TensorCore)
        k = pl.program_id(1)          # reduction step
    else:
        c = 0
        k = pl.program_id(0)

    @pl.when(k == 0)
    def _():
        o_ref[...] = jnp.zeros_like(o_ref)

    x = x_ref[...].astype(jnp.float32)
    y = y_ref[...].astype(jnp.float32)
    diff = y - x
    # diff * (tau if diff > 0 else tau - 1)  ==  the torch formula, one select.
    loss = diff * jnp.where(diff > 0.0, tau, tau - 1.0)

    def _accum(vals):
        # (tile_rows,128) -> (tile_rows//8, 8, 128), sum over leading axis:
        # pure VPU vreg adds into the single resident (8,128) output block.
        o_ref[...] += vals.reshape(tile_rows // SUBLANES, SUBLANES, LANES).sum(axis=0)

    if not needs_mask:
        _accum(loss)                                   # hot path, no masking
    else:
        blk = c * tiles_per_core + k                   # un-clamped logical tile id
        is_edge = (blk + 1) * tile_rows > rows         # ragged-last / clamped dup

        @pl.when(jnp.logical_not(is_edge))
        def _():
            _accum(loss)                               # interior tiles: no mask

        @pl.when(is_edge)
        def _():
            row = jax.lax.broadcasted_iota(jnp.int32, loss.shape, 0)
            valid = (blk * tile_rows + row) < rows     # zero-padded lanes need no mask
            _accum(jnp.where(valid, loss, 0.0))


def _input_spec(tile_rows, index_map, n_buffers):
    if n_buffers > 2:
        try:
            return pl.BlockSpec((tile_rows, LANES), index_map,
                                pipeline_mode=pl.Buffered(n_buffers))
        except TypeError:
            pass
    return pl.BlockSpec((tile_rows, LANES), index_map)


def check_loss(x, y, tau=0.5, reduction="mean", max_tile_rows=MAX_TILE_ROWS):
    """Pallas equivalent of check(taus=tau, reduction=reduction)(x, y)."""
    assert x.shape == y.shape
    assert max_tile_rows >= SUBLANES and max_tile_rows % SUBLANES == 0
    if reduction != "mean":
        # TODO(synk): only reduction='mean' (the module default) is implemented;
        # the unreduced path would just be the elementwise loss kernel.
        raise NotImplementedError("only reduction='mean' is implemented")

    total_n = x.size
    if total_n == 0:
        return jnp.array(jnp.nan, dtype=jnp.float32)   # torch.mean(empty) == nan

    xf = x.reshape(-1)
    yf = y.reshape(-1)

    # TODO(synk): when numel % 128 != 0 we still jnp.pad (one extra HBM copy of
    # both inputs). Padded zeros contribute exactly zero loss, so no lane mask is
    # needed in-kernel; a truly zero-copy path would need 1-D blocks plus an
    # in-kernel (N,) -> (N//128,128) reshape, which is a riskier lowering.
    rem = total_n % LANES
    if rem:
        xf = jnp.pad(xf, (0, LANES - rem))
        yf = jnp.pad(yf, (0, LANES - rem))
    rows = xf.shape[0] // LANES

    x2 = xf.reshape(rows, LANES)
    y2 = yf.reshape(rows, LANES)

    tile_rows = min(max_tile_rows, _round_up(rows, SUBLANES))
    n_row_tiles = pl.cdiv(rows, tile_rows)

    # Split the reduction across two TensorCores only when that is real hardware
    # parallelism (v7x) and there is more than one tile; on 1-TC chips (v5e/v6e)
    # or single-tile inputs the split is pure overhead (duplicate DMA + epilogue).
    num_partials = 2 if (_is_multi_tensorcore_chip() and n_row_tiles >= 2) else 1
    tiles_per_core = pl.cdiv(n_row_tiles, num_partials)
    max_block = n_row_tiles - 1
    two_partials = num_partials == 2

    needs_mask = (n_row_tiles * tile_rows > rows) or (
        num_partials * tiles_per_core > n_row_tiles)

    kernel = functools.partial(
        _check_loss_kernel, tau=float(tau), tile_rows=tile_rows,
        tiles_per_core=tiles_per_core, rows=rows, needs_mask=needs_mask,
        two_partials=two_partials)

    n_buffers = 3 if tiles_per_core >= 2 else 2

    if two_partials:
        grid = (num_partials, tiles_per_core)
        in_map = lambda c, k: (jnp.minimum(c * tiles_per_core + k, max_block), 0)
        out_map = lambda c, k: (c, 0)
        sem_attempts = [(pltpu.CORE_PARALLEL, pltpu.ARBITRARY),
                        ("parallel", "arbitrary")]
    else:
        grid = (tiles_per_core,)
        in_map = lambda k: (k, 0)
        out_map = lambda k: (0, 0)
        sem_attempts = [("arbitrary",)]

    # Config attempts in decreasing performance order; fall back on any failure so
    # the kernel always runs (e.g. CORE_PARALLEL or Buffered(3) unsupported).
    attempts = [(sem, n_buffers) for sem in sem_attempts]
    if n_buffers > 2:
        attempts.append((sem_attempts[-1], 2))

    cost = pl.CostEstimate(
        flops=5 * total_n,
        transcendentals=0,
        bytes_accessed=total_n * (x.dtype.itemsize + y.dtype.itemsize)
        + num_partials * SUBLANES * LANES * 4,
    )

    last_err = None
    for sem, nbuf in attempts:
        try:
            partials = pl.pallas_call(
                kernel,
                out_shape=jax.ShapeDtypeStruct(
                    (num_partials * SUBLANES, LANES), jnp.float32),
                grid_spec=pltpu.PrefetchScalarGridSpec(
                    num_scalar_prefetch=0,
                    grid=grid,
                    in_specs=[_input_spec(tile_rows, in_map, nbuf),
                              _input_spec(tile_rows, in_map, nbuf)],
                    out_specs=pl.BlockSpec((SUBLANES, LANES), out_map),
                ),
                compiler_params=pltpu.CompilerParams(dimension_semantics=sem),
                cost_estimate=cost,
            )(x2, y2)
            # Masked rows / padded lanes / clamped blocks contributed exactly 0,
            # so the mean is just the total over all partial blocks / numel.
            return jnp.sum(partials) / jnp.float32(total_n)
        except Exception as e:  # noqa: BLE001 - retry with a safer config
            last_err = e
    raise last_err


def _ref_check(x, y, tau):
    diff = y.astype(jnp.float32) - x.astype(jnp.float32)
    idx = (diff > 0).astype(jnp.float32)
    return jnp.mean(diff * (tau - 1.0) * (1.0 - idx) + tau * idx * diff)


if __name__ == "__main__":
    key = jax.random.PRNGKey(0)
    kx, ky = jax.random.split(key)
    x = jax.random.normal(kx, (2, 4, 16, 16), dtype=jnp.float32)
    y = jax.random.normal(ky, (2, 4, 16, 16), dtype=jnp.float32)
    tau = 0.7

    out = jax.block_until_ready(check_loss(x, y, tau=tau))
    ref = _ref_check(x, y, tau)
    assert jnp.allclose(out, ref, atol=1e-6, rtol=1e-5), (out, ref)

    # element count not a multiple of 128 (pad path + single ragged block)
    kx2, ky2 = jax.random.split(jax.random.PRNGKey(1))
    x2 = jax.random.normal(kx2, (3, 5, 7, 11), dtype=jnp.float32)
    y2 = jax.random.normal(ky2, (3, 5, 7, 11), dtype=jnp.float32)
    out2 = jax.block_until_ready(check_loss(x2, y2, tau=0.25))
    ref2 = _ref_check(x2, y2, 0.25)
    assert jnp.allclose(out2, ref2, atol=1e-6, rtol=1e-5), (out2, ref2)

    # multi-tile path at small scale (tiny tile override, exercises Buffered(3))
    out3 = jax.block_until_ready(check_loss(x, y, tau=tau, max_tile_rows=8))
    assert jnp.allclose(out3, ref, atol=1e-6, rtol=1e-5), (out3, ref)

    # odd number of row tiles (ragged last block; clamped duplicate on 2-TC chips)
    kx4, ky4 = jax.random.split(jax.random.PRNGKey(2))
    x4 = jax.random.normal(kx4, (1, 20, 128), dtype=jnp.float32)
    y4 = jax.random.normal(ky4, (1, 20, 128), dtype=jnp.float32)
    out4 = jax.block_until_ready(check_loss(x4, y4, tau=tau, max_tile_rows=8))
    ref4 = _ref_check(x4, y4, tau)
    assert jnp.allclose(out4, ref4, atol=1e-6, rtol=1e-5), (out4, ref4)

    # bf16 inputs: no wrapper upcast, kernel casts to f32 internally
    xb = x.astype(jnp.bfloat16)
    yb = y.astype(jnp.bfloat16)
    outb = jax.block_until_ready(check_loss(xb, yb, tau=tau))
    refb = _ref_check(xb, yb, tau)
    assert jnp.allclose(outb, refb, atol=1e-6, rtol=1e-5), (outb, refb)

    print("KERNEL_OK")
</pallas_src>

<mosaic_0001>
module attributes {stable_mosaic.version = 11 : i64} {
  func.func @_check_loss_kernel(%arg0: i32, %arg1: memref<16x128xf32, #tpu.memory_space<vmem>>, %arg2: memref<16x128xf32, #tpu.memory_space<vmem>>, %arg3: memref<8x128xf32, #tpu.memory_space<vmem>>) attributes {dimension_semantics = [#tpu.dimension_semantics<arbitrary>], iteration_bounds = array<i64: 1>, scalar_prefetch = 0 : i64, scratch_operands = 0 : i64, tpu.core_type = #tpu.core_type<tc>, window_params = [{transform_indices = @transform_0, window_bounds = array<i64: 16, 128>}, {transform_indices = @transform_1, window_bounds = array<i64: 16, 128>}, {pipeline_mode = #tpu.pipeline_mode<synchronous>, transform_indices = @transform_2, window_bounds = array<i64: 8, 128>}]} {
    %c0_i32 = arith.constant 0 : i32
    %0 = arith.cmpi eq, %arg0, %c0_i32 : i32
    %1 = arith.extui %0 : i1 to i32
    %c0_i32_0 = arith.constant 0 : i32
    %2 = arith.cmpi ne, %1, %c0_i32_0 : i32
    scf.if %2 {
      %cst_11 = arith.constant 0.000000e+00 : f32
      %17 = vector.broadcast %cst_11 : f32 to vector<8x128xf32>
      %c0_12 = arith.constant 0 : index
      %c0_13 = arith.constant 0 : index
      %18 = vector.load %arg3[%c0_12, %c0_13] : memref<8x128xf32, #tpu.memory_space<vmem>>, vector<8x128xf32>
      tpu.vector_store %arg3[%c0_12, %c0_13], %17 {strides = array<i32>} : memref<8x128xf32, #tpu.memory_space<vmem>>, vector<8x128xf32>,
    } else {
    }
    %c0 = arith.constant 0 : index
    %c0_1 = arith.constant 0 : index
    %3 = vector.load %arg1[%c0, %c0_1] : memref<16x128xf32, #tpu.memory_space<vmem>>, vector<16x128xf32>
    %c0_2 = arith.constant 0 : index
    %c0_3 = arith.constant 0 : index
    %4 = vector.load %arg2[%c0_2, %c0_3] : memref<16x128xf32, #tpu.memory_space<vmem>>, vector<16x128xf32>
    %5 = arith.subf %4, %3 : vector<16x128xf32>
    %cst = arith.constant 0.000000e+00 : f32
    %6 = vector.broadcast %cst : f32 to vector<16x128xf32>
    %7 = arith.cmpf ogt, %5, %6 : vector<16x128xf32>
    %cst_4 = arith.constant 0.699999988 : f32
    %cst_5 = arith.constant -3.000000e-01 : f32
    %8 = vector.broadcast %cst_4 : f32 to vector<16x128xf32>
    %9 = vector.broadcast %cst_5 : f32 to vector<16x128xf32>
    %10 = arith.select %7, %8, %9 : vector<16x128xi1>, vector<16x128xf32>
    %11 = arith.mulf %5, %10 : vector<16x128xf32>
    %c0_6 = arith.constant 0 : index
    %c0_7 = arith.constant 0 : index
    %12 = vector.load %arg3[%c0_6, %c0_7] : memref<8x128xf32, #tpu.memory_space<vmem>>, vector<8x128xf32>
    %13 = vector.shape_cast %11 : vector<16x128xf32> to vector<2x8x128xf32>
    %cst_8 = arith.constant dense<0.000000e+00> : vector<8x128xf32>
    %14 = vector.multi_reduction <add>, %13, %cst_8 [0] : vector<2x8x128xf32> to vector<8x128xf32>
    %15 = arith.addf %12, %14 : vector<8x128xf32>
    %c0_9 = arith.constant 0 : index
    %c0_10 = arith.constant 0 : index
    %16 = vector.load %arg3[%c0_9, %c0_10] : memref<8x128xf32, #tpu.memory_space<vmem>>, vector<8x128xf32>
    tpu.vector_store %arg3[%c0_9, %c0_10], %15 {strides = array<i32>} : memref<8x128xf32, #tpu.memory_space<vmem>>, vector<8x128xf32>,
    return
  }
  func.func @transform_0(%arg0: i32) -> (i32, i32) {
    %c0_i32 = arith.constant 0 : i32
    %c0_i32_0 = arith.constant 0 : i32
    return %arg0, %c0_i32 : i32, i32
  }
  func.func @transform_1(%arg0: i32) -> (i32, i32) {
    %c0_i32 = arith.constant 0 : i32
    %c0_i32_0 = arith.constant 0 : i32
    return %arg0, %c0_i32 : i32, i32
  }
  func.func @transform_2(%arg0: i32) -> (i32, i32) {
    %c0_i32 = arith.constant 0 : i32
    %c0_i32_0 = arith.constant 0 : i32
    %c0_i32_1 = arith.constant 0 : i32
    return %c0_i32, %c0_i32_0 : i32, i32
  }
}

</mosaic_0001>

<llo_original>
// kernel: tpu_custom_call.1
$region0: #{tpu_custom_call.1}
  #allocation0 [shape = 'u32[]', space=smem, size = 0x4, offset = 0x4, fixed_abs, tag = 'smem constant byte address 0x4 - core index']
  #allocation1 [shape = 'u32[72,128]{1,0:T(1,128)}', space=vmem, size = 0x9000, scoped, tag = 'internal scratch']
  %s0 = inlined_call_operand.hbm [shape: f32[16,128], index: 0, kind: input, shape index: {}]
  %s1 = inlined_call_operand.hbm [shape: f32[16,128], index: 1, kind: input, shape index: {}]
  %s2 = inlined_call_operand.hbm [shape: f32[8,128], index: 2, kind: output, shape index: {}]
  %s3 = sld [smem:[#allocation0]]
  $region30: #{tpu_custom_call.1} parent=0
    _
  %s5 = ssub.s32 1, %s3
  %s6 = scalar_select 0, %s5, %s3
  $region1: #{tpu_custom_call.1} parent=0
    #allocation2 [shape = 'u8[8192]{0}', space=vmem, size = 0x2000, scoped, tag = 'input window, operand 0, single buffered']
    #allocation3 [shape = 's32[1]{0}', space=sflag, size = 0x4, scoped, tag = 'scoped memory for tpu_custom_call.1']
    #allocation4 [shape = 's32[1]{0}', space=sflag, size = 0x4, scoped, tag = 'scoped memory for tpu_custom_call.1']
    #allocation5 [shape = 'u8[8192]{0}', space=vmem, size = 0x2000, scoped, tag = 'input window, operand 1, single buffered']
    #allocation6 [shape = 's32[1]{0}', space=sflag, size = 0x4, scoped, tag = 'scoped memory for tpu_custom_call.1']
    #allocation7 [shape = 'u8[4096]{0}', space=vmem, size = 0x1000, scoped, tag = 'output window, operand 0, single buffered']
    %7 = vsyncpa [#allocation3], 0
    %8 = vsyncpa [#allocation6], 0
    %9 = vsyncpa [#allocation4], 0
    // Predicated region
    $region2: #{tpu_custom_call.1} parent=1 // pred_check
      _
    $region3: #{tpu_custom_call.1} parent=1 // pred_check_branch
      %11 = sbr.rel (0) target = $region5
    $region4: #{tpu_custom_call.1} parent=1 // pred_region
      %13 = vsyncadd [#allocation3], 0
      %s14 = sshll.u32 %s0, 4
      %s15 = int_to_ptr.hbm [resolvable:$true] %s14
      %s16 = sshll.u32 [#allocation2], 4
      %s17 = int_to_ptr.vmem [resolvable:$true] %s16
      %22 = dma.hbm_to_vmem [thread:$0]  %s15, 256, %s17, [#allocation3], 128, 128, 8
    $region5: #{tpu_custom_call.1} parent=1 // pred_fallthru
      _
    // Predicated region
    $region6: #{tpu_custom_call.1} parent=1 // pred_check
      _
    $region7: #{tpu_custom_call.1} parent=1 // pred_check_branch
      %24 = sbr.rel (0) target = $region9
    $region8: #{tpu_custom_call.1} parent=1 // pred_region
      %26 = vsyncadd [#allocation6], 0
      %s27 = sshll.u32 %s1, 4
      %s28 = int_to_ptr.hbm [resolvable:$true] %s27
      %s29 = sshll.u32 [#allocation5], 4
      %s30 = int_to_ptr.vmem [resolvable:$true] %s29
      %35 = dma.hbm_to_vmem [thread:$0]  %s28, 256, %s30, [#allocation6], 128, 128, 8
    $region9: #{tpu_custom_call.1} parent=1 // pred_fallthru
      _
    // Predicated region
    $region10: #{tpu_custom_call.1} parent=1 // pred_check
      _
    $region11: #{tpu_custom_call.1} parent=1 // pred_check_branch
      %37 = sbr.rel (0) target = $region13
    $region12: #{tpu_custom_call.1} parent=1 // pred_region
      %39 = dma.done [#allocation3], 256
    $region13: #{tpu_custom_call.1} parent=1 // pred_fallthru
      _
    // Predicated region
    $region14: #{tpu_custom_call.1} parent=1 // pred_check
      _
    $region15: #{tpu_custom_call.1} parent=1 // pred_check_branch
      %41 = sbr.rel (0) target = $region17
    $region16: #{tpu_custom_call.1} parent=1 // pred_region
      %43 = dma.done [#allocation6], 256
    $region17: #{tpu_custom_call.1} parent=1 // pred_fallthru
      _
    %p44 = scmp.eq.s32.totalorder 0, 0
    // Predicated region
    $region18: #{tpu_custom_call.1} parent=1 // pred_check
      %p45 = pneg %p44
    $region19: #{tpu_custom_call.1} parent=1 // pred_check_branch
      %47 = sbr.rel (%p45) target = $region21
    $region20: #{tpu_custom_call.1} parent=1 // pred_region
      %48 = vst [vmem:[#allocation7] sm:$0xff] 0.0
    $region21: #{tpu_custom_call.1} parent=1 // pred_fallthru
      _
    %v49 = vld [vmem:[#allocation2] sm:$0xff]
    %v50 = vld [vmem:[#allocation2 + $0x8] sm:$0xff]
    %v51 = vld [vmem:[#allocation5] sm:$0xff]
    %v52 = vld [vmem:[#allocation5 + $0x8] sm:$0xff]
    %v53 = vsub.f32 %v51, %v49
    %v54 = vsub.f32 %v52, %v50
    %vm55 = vcmp.gt.f32.partialorder %v53, 0.0
    %vm56 = vcmp.gt.f32.partialorder %v54, 0.0
    %v57 = vsel %vm55, 0.7, -0.3
    %v58 = vsel %vm56, 0.7, -0.3
    %v59 = vmul.f32 %v53, %v57
    %v60 = vmul.f32 %v54, %v58
    %v61 = vld [vmem:[#allocation7] sm:$0xff]
    %v62 = vadd.f32 %v59, %v60
    %v63 = vadd.f32 %v61, %v62
    %64 = vst [vmem:[#allocation7] sm:$0xff] %v63
    // Predicated region
    $region22: #{tpu_custom_call.1} parent=1 // pred_check
      _
    $region23: #{tpu_custom_call.1} parent=1 // pred_check_branch
      %66 = sbr.rel (0) target = $region25
    $region24: #{tpu_custom_call.1} parent=1 // pred_region
      %68 = vsyncadd [#allocation4], 0
      %s70 = sshll.u32 [#allocation7], 4
      %s71 = int_to_ptr.vmem [resolvable:$true] %s70
      %s72 = sshll.u32 %s2, 4
      %s73 = int_to_ptr.hbm [resolvable:$true] %s72
      %75 = dma.vmem_to_hbm [thread:$0]  %s71, 128, %s73, [#allocation4]
    $region25: #{tpu_custom_call.1} parent=1 // pred_fallthru
      _
    // Predicated region
    $region26: #{tpu_custom_call.1} parent=1 // pred_check
      _
    $region27: #{tpu_custom_call.1} parent=1 // pred_check_branch
      %77 = sbr.rel (0) target = $region29
    $region28: #{tpu_custom_call.1} parent=1 // pred_region
      %79 = dma.done [#allocation4], 128
    $region29: #{tpu_custom_call.1} parent=1 // pred_fallthru
      _
    %80 = vsyncpa [#allocation3], 1
    %81 = vsyncpa [#allocation6], 1
    %82 = vsyncpa [#allocation4], 1

</llo_original>
